<compile_context>
chip_gen: v5e
topology: v5e:2x2
jax: 0.10.0
libtpu: 0.0.40
codegen_flags: <defaults>
</compile_context>

<pallas_src>
import functools

import jax
import jax.numpy as jnp
from jax import lax
from jax.experimental import pallas as pl
from jax.experimental.pallas import tpu as pltpu


# --------------------------------------------------------------------------
# Kernels
# --------------------------------------------------------------------------
def _stats_kernel(x_ref, xsum_ref, gram_ref, *, mxu_dtype):
    """Accumulate sum(x) (Cin,1) and Gram(x) = x @ x^T (Cin,Cin) over HW tiles.

    GroupNorm statistics of z = W @ x are recovered in cheap JAX glue
    (zsum = W xsum, zsq_c = w_c G w_c^T), so pass 1 never materialises the
    (Cexp, thw) expanded tile.
    """
    @pl.when(pl.program_id(2) == 0)
    def _init():
        xsum_ref[...] = jnp.zeros_like(xsum_ref)
        gram_ref[...] = jnp.zeros_like(gram_ref)

    x = x_ref[0].astype(mxu_dtype)                               # (Cin, thw)
    xsum_ref[0, 0] += jnp.sum(x.astype(jnp.float32), axis=1, keepdims=True)
    gram_ref[0, 0] += lax.dot_general(                           # x @ x^T
        x, x, (((1,), (1,)), ((), ())),
        preferred_element_type=jnp.float32)


def _expand_kernel(x_ref, w_ref, shift_ref, o_ref, *, mxu_dtype, fused,
                   cout, s, rows, img_w):
    """y = (scale*W) @ x + shift, optionally pixel-shuffled in VMEM.

    x_ref     : (1, Cin, thw)      NCHW input, spatial flattened (thw = rows*W)
    w_ref     : (1, Cexp, Cin)     per-batch scale-folded 1x1 conv weight
    shift_ref : (1, Cexp, 1)       fused bias/mean/rstd/gamma/beta shift (f32)
    o_ref     : fused  -> (1, Cout, rows*s, W*s)   final NCHW block
                unfused-> (1, Cexp, thw)           pre-shuffle channels-first
    """
    x = x_ref[0].astype(mxu_dtype)                               # (Cin, thw)
    z = jnp.dot(w_ref[0], x, preferred_element_type=jnp.float32)
    y = z + shift_ref[0]                                         # (Cexp, thw)
    if fused:
        # 'b (c p1 p2) h w -> b c (h p1) (w p2)' done in VMEM (XLU relayout):
        # removes a full HBM read+write of the expanded tensor.
        y = y.reshape(cout, s, s, rows, img_w)
        y = jnp.transpose(y, (0, 3, 1, 4, 2))
        y = y.reshape(cout, rows * s, img_w * s)
    o_ref[0] = y.astype(o_ref.dtype)


# --------------------------------------------------------------------------
# Tiling / VMEM helpers
# --------------------------------------------------------------------------
def _round_up(a, m):
    return (a + m - 1) // m * m


def _vmem_budget_bytes():
    """Generation-aware VMEM budget (v5e/v6e: ~100 MiB, v7x/unknown: ~48 MiB)."""
    try:
        cap = int(getattr(pltpu.get_tpu_info(), "vmem_capacity_bytes", 0))
    except Exception:
        cap = 0
    if cap >= (96 << 20):          # v5e / v6e: 128 MiB physical VMEM
        return 100 << 20
    return 48 << 20                # v7x (64 MiB physical) or unknown: be safe


def _tile_bytes(cin, cexp, thw, x_itm, o_itm, w_itm, o_lane):
    """Rough per-stage VMEM need for pass 2 (double-buffered blocks + z)."""
    x_blk = cin * _round_up(thw, 128) * x_itm
    o_blk = (cexp * thw // o_lane) * _round_up(o_lane, 128) * o_itm
    w_blk = cexp * cin * w_itm + cexp * 4
    z_f32 = cexp * thw * 4
    return 2 * (x_blk + o_blk + w_blk) + 2 * z_f32 + (2 << 20)


def _choose_tile(H, W, s, cin, cexp, x_itm, o_itm, w_itm, budget):
    """Pick thw (spatial tile). Returns (thw, fused_shuffle_possible, est_bytes)."""
    HW = H * W
    # Fused-shuffle candidates: whole input rows per tile, largest that fits.
    for r in range(H, 0, -1):
        if H % r:
            continue
        if r != H and ((r * s) % 8 or (r * W) % 128):
            continue
        est = _tile_bytes(cin, cexp, r * W, x_itm, o_itm, w_itm, W * s)
        if est <= budget:
            return r * W, True, est
    # Plain lane-dense tiles (pre-shuffle output + XLA pixel shuffle).
    best = None
    t = 128
    while t <= HW:
        if HW % t == 0:
            est = _tile_bytes(cin, cexp, t, x_itm, o_itm, w_itm, t)
            if est <= budget:
                best = (t, est)
        t += 128
    if best is not None:
        return best[0], False, best[1]
    # TODO(synk): masked tail tile instead of a full-HW fallback for huge HW.
    return HW, False, _tile_bytes(cin, cexp, HW, x_itm, o_itm, w_itm, HW)


def _build_expand_call(B, Cin, Cexp, Cout, H, W, s, thw, x_dtype, mxu_dtype,
                       out_dtype, fused, vmem):
    """Build the pass-2 pallas_call (fused in-kernel shuffle or pre-shuffle)."""
    HW = H * W
    n_hw = HW // thw
    rows = thw // W if fused else 0
    kernel = functools.partial(_expand_kernel, mxu_dtype=mxu_dtype, fused=fused,
                               cout=Cout, s=s, rows=rows, img_w=W)
    if fused:
        out_shape = jax.ShapeDtypeStruct((B, Cout, H * s, W * s), out_dtype)
        out_spec = pl.BlockSpec((1, Cout, rows * s, W * s),
                                lambda i, j: (i, 0, j, 0))
    else:
        out_shape = jax.ShapeDtypeStruct((B, Cexp, HW), out_dtype)
        out_spec = pl.BlockSpec((1, Cexp, thw), lambda i, j: (i, 0, j))
    return pl.pallas_call(
        kernel,
        out_shape=out_shape,
        grid=(B, n_hw),
        in_specs=[
            pl.BlockSpec((1, Cin, thw), lambda i, j: (i, 0, j)),
            pl.BlockSpec((1, Cexp, Cin), lambda i, j: (i, 0, 0)),
            pl.BlockSpec((1, Cexp, 1), lambda i, j: (i, 0, 0)),
        ],
        out_specs=out_spec,
        compiler_params=pltpu.CompilerParams(
            dimension_semantics=("parallel", "parallel"),
            vmem_limit_bytes=vmem),
    )


_FUSE_PROBE_CACHE = {}


def _fused_shuffle_supported(key, builder, arg_structs):
    """Compile-probe the fused (in-kernel pixel shuffle) pass-2 kernel once."""
    ok = _FUSE_PROBE_CACHE.get(key)
    if ok is None:
        try:
            jax.jit(builder).lower(*arg_structs).compile()
            ok = True
        except Exception:
            ok = False
        _FUSE_PROBE_CACHE[key] = ok
    return ok


# --------------------------------------------------------------------------
# Wrapper
# --------------------------------------------------------------------------
def patch_expanding(x_nchw, w, b, gamma, beta, *, scale_factor=2, num_groups=1,
                    eps=1e-5, mxu_dtype=jnp.bfloat16, out_dtype=None,
                    fuse_shuffle="auto"):
    """PatchExpanding forward (matches the PyTorch module, dim=2 only).

    x_nchw : (B, Cin, H, W)  NCHW input.
    w      : (Cexp, Cin)     1x1 conv weight, Cexp = Cout * scale_factor**2
                             (PyTorch weight (Cexp, Cin, 1, 1) squeezed).
    b      : (Cexp,)         conv bias.
    gamma, beta : (Cout,)    GroupNorm affine parameters.
    Returns (B, Cout, H*s, W*s) NCHW.  With mxu_dtype=bfloat16 the MXU
    operands are bf16 (f32 accumulation); the result matches the f32 module
    to bf16 tolerance only.
    """
    B, Cin, H, W = x_nchw.shape
    Cexp, Cin_w = w.shape
    s = int(scale_factor)
    assert Cin_w == Cin, (w.shape, x_nchw.shape)
    assert Cexp % (s * s) == 0, (Cexp, s)
    Cout = Cexp // (s * s)
    G = int(num_groups)
    assert Cout % G == 0, f"out_channels={Cout} not divisible by groups={G}"
    HW = H * W
    f32 = jnp.float32
    out_dtype = jnp.dtype(x_nchw.dtype if out_dtype is None else out_dtype)
    x_itm = jnp.dtype(x_nchw.dtype).itemsize
    w_itm = jnp.dtype(mxu_dtype).itemsize

    budget = _vmem_budget_bytes()
    thw, fused_tile_ok, est = _choose_tile(H, W, s, Cin, Cexp, x_itm,
                                           out_dtype.itemsize, w_itm, budget)
    n_hw = HW // thw
    vmem = int(min(max(est, 16 << 20), budget))

    x2 = x_nchw.reshape(B, Cin, HW)            # free reshape, stays NCHW order

    # ---- pass 1: per-batch sum(x) and Gram(x) over HW (Gram-trick stats) ---
    # Extra leading "split" axis keeps both v7x TensorCores busy when B == 1.
    split = 2 if (B == 1 and n_hw >= 2 and n_hw % 2 == 0) else 1
    n_chunk = n_hw // split
    stats_kernel = functools.partial(_stats_kernel, mxu_dtype=mxu_dtype)
    xsum_p, gram_p = pl.pallas_call(
        stats_kernel,
        out_shape=(jax.ShapeDtypeStruct((split, B, Cin, 1), f32),
                   jax.ShapeDtypeStruct((split, B, Cin, Cin), f32)),
        grid=(split, B, n_chunk),
        in_specs=[pl.BlockSpec((1, Cin, thw),
                               lambda sp, i, j: (i, 0, sp * n_chunk + j))],
        out_specs=(
            pl.BlockSpec((1, 1, Cin, 1), lambda sp, i, j: (sp, i, 0, 0)),
            pl.BlockSpec((1, 1, Cin, Cin), lambda sp, i, j: (sp, i, 0, 0)),
        ),
        compiler_params=pltpu.CompilerParams(
            dimension_semantics=("parallel", "parallel", "arbitrary"),
            vmem_limit_bytes=vmem),
    )(x2)

    # ---- tiny glue on (B, Cexp): Gram -> z stats, group reduce, scale/shift -
    xsum = jnp.sum(xsum_p, axis=0)[..., 0]                        # (B, Cin)
    gram = jnp.sum(gram_p, axis=0)                                # (B, Cin, Cin)
    wf = w.astype(mxu_dtype).astype(f32)                          # operand prec.
    b32 = b.astype(f32)
    zsum = jnp.einsum('ci,bi->bc', wf, xsum)                      # sum_hw z
    zsq = jnp.einsum('bij,ci,cj->bc', gram, wf, wf)               # sum_hw z^2
    # statistics of y = z + bias
    ysum = zsum + HW * b32[None, :]
    ysq = zsq + 2.0 * b32[None, :] * zsum + HW * jnp.square(b32)[None, :]
    ce_per_g = (Cout // G) * s * s            # conv channels per GroupNorm group
    n_per_g = HW * ce_per_g                   # == (Cout/G) * (H*s) * (W*s)
    gsum = ysum.reshape(B, G, ce_per_g).sum(-1)
    gsq = ysq.reshape(B, G, ce_per_g).sum(-1)
    mean = gsum / n_per_g
    var = jnp.maximum(gsq / n_per_g - jnp.square(mean), 0.0)
    rstd = lax.rsqrt(var + eps)                                   # (B, G)

    gamma_e = jnp.repeat(gamma.astype(f32), s * s)                # (Cexp,)
    beta_e = jnp.repeat(beta.astype(f32), s * s)
    mean_e = jnp.repeat(mean, ce_per_g, axis=1)                   # (B, Cexp)
    rstd_e = jnp.repeat(rstd, ce_per_g, axis=1)
    scale = rstd_e * gamma_e[None, :]                             # (B, Cexp)
    shift = (b32[None, :] - mean_e) * scale + beta_e[None, :]     # (B, Cexp)
    w_scaled = (scale[:, :, None] * wf[None, :, :]).astype(mxu_dtype)
    shift_a = shift[:, :, None].astype(f32)                       # (B, Cexp, 1)

    # ---- pass 2: recompute z (memory-bound), normalise, (fused) shuffle ----
    want_fused = fused_tile_ok and (fuse_shuffle is not False) and s > 1
    use_fused = False
    if want_fused:
        fused_call = _build_expand_call(B, Cin, Cexp, Cout, H, W, s, thw,
                                        x2.dtype, mxu_dtype, out_dtype, True,
                                        vmem)
        if fuse_shuffle is True:
            use_fused = True
        else:  # "auto": probe whether Mosaic lowers the in-kernel relayout
            key = (B, Cin, Cexp, Cout, H, W, s, thw, str(jnp.dtype(x2.dtype)),
                   str(jnp.dtype(mxu_dtype)), str(out_dtype))
            structs = (jax.ShapeDtypeStruct(x2.shape, x2.dtype),
                       jax.ShapeDtypeStruct((B, Cexp, Cin), jnp.dtype(mxu_dtype)),
                       jax.ShapeDtypeStruct((B, Cexp, 1), f32))
            use_fused = _fused_shuffle_supported(key, fused_call, structs)

    if use_fused:
        return fused_call(x2, w_scaled, shift_a)

    # Fallback: pre-shuffle channels-first output + one XLA pixel shuffle.
    plain_call = _build_expand_call(B, Cin, Cexp, Cout, H, W, s, thw,
                                    x2.dtype, mxu_dtype, out_dtype, False, vmem)
    y = plain_call(x2, w_scaled, shift_a)
    y = y.reshape(B, Cout, s, s, H, W)
    y = jnp.transpose(y, (0, 1, 4, 2, 5, 3)).reshape(B, Cout, H * s, W * s)
    return y


# --------------------------------------------------------------------------
# Pure-JAX reference mirroring the PyTorch forward (f32)
# --------------------------------------------------------------------------
def _reference(x, w, b, gamma, beta, *, scale_factor, num_groups, eps):
    B, Cin, H, W = x.shape
    Cexp = w.shape[0]
    s = scale_factor
    Cout = Cexp // (s * s)
    y = jnp.einsum('bchw,dc->bdhw', x.astype(jnp.float32),
                   w.astype(jnp.float32), precision=lax.Precision.HIGHEST)
    y = y + b.astype(jnp.float32)[None, :, None, None]
    y = y.reshape(B, Cout, s, s, H, W)
    y = jnp.transpose(y, (0, 1, 4, 2, 5, 3)).reshape(B, Cout, H * s, W * s)
    yg = y.reshape(B, num_groups, -1)
    mean = jnp.mean(yg, axis=-1, keepdims=True)
    var = jnp.mean(jnp.square(yg - mean), axis=-1, keepdims=True)
    yn = ((yg - mean) * lax.rsqrt(var + eps)).reshape(y.shape)
    return yn * gamma[None, :, None, None] + beta[None, :, None, None]


# --------------------------------------------------------------------------
# Test
# --------------------------------------------------------------------------
if __name__ == "__main__":
    eps = 1e-5
    configs = [
        # name         B  Cin  H   W  Cout s  G  mxu_dtype     fuse     tol
        ("f32_g1",     2,  4, 16, 16,  4,  2, 1, jnp.float32,  "auto",  2e-3),
        ("bf16_g2",    2,  4, 16, 16,  8,  2, 2, jnp.bfloat16, "auto",  2e-1),
        ("f32_g4_nf",  1,  8,  8,  8,  4,  2, 4, jnp.float32,  False,   2e-3),
    ]
    key = jax.random.PRNGKey(0)
    for name, B, Cin, H, W, Cout, s, G, mxu, fuse, tol in configs:
        Cexp = Cout * s * s
        key, kx, kw, kb, kg, kbe = jax.random.split(key, 6)
        x = jax.random.normal(kx, (B, Cin, H, W), jnp.float32)
        # PyTorch conv_nd(2, Cin, Cexp, k=1) weight (Cexp, Cin, 1, 1) squeezed
        w = 0.1 * jax.random.normal(kw, (Cexp, Cin), jnp.float32)
        b = 0.1 * jax.random.normal(kb, (Cexp,), jnp.float32)
        gamma = 1.0 + 0.1 * jax.random.normal(kg, (Cout,), jnp.float32)
        beta = 0.1 * jax.random.normal(kbe, (Cout,), jnp.float32)

        fn = jax.jit(functools.partial(
            patch_expanding, scale_factor=s, num_groups=G, eps=eps,
            mxu_dtype=mxu, fuse_shuffle=fuse))
        out = jax.block_until_ready(fn(x, w, b, gamma, beta))
        assert out.shape == (B, Cout, H * s, W * s), (name, out.shape)

        ref = _reference(x, w, b, gamma, beta, scale_factor=s,
                         num_groups=G, eps=eps)
        err = float(jnp.max(jnp.abs(out.astype(jnp.float32) - ref)))
        assert err <= tol, (name, err)

    print("KERNEL_OK")
</pallas_src>

<mosaic_0001>
module attributes {stable_mosaic.version = 11 : i64} {
  func.func @_stats_kernel(%arg0: i32, %arg1: i32, %arg2: i32, %arg3: memref<1x4x256xf32, #tpu.memory_space<vmem>>, %arg4: memref<1x1x4x1xf32, #tpu.memory_space<vmem>>, %arg5: memref<1x1x4x4xf32, #tpu.memory_space<vmem>>) attributes {dimension_semantics = [#tpu.dimension_semantics<parallel>, #tpu.dimension_semantics<parallel>, #tpu.dimension_semantics<arbitrary>], iteration_bounds = array<i64: 1, 2, 1>, scalar_prefetch = 0 : i64, scratch_operands = 0 : i64, tpu.core_type = #tpu.core_type<tc>, window_params = [{transform_indices = @transform_0, window_bounds = array<i64: 1, 4, 256>}, {transform_indices = @transform_1, window_bounds = array<i64: 1, 1, 4, 1>}, {transform_indices = @transform_2, window_bounds = array<i64: 1, 1, 4, 4>}]} {
    %c0_i32 = arith.constant 0 : i32
    %0 = arith.cmpi eq, %arg2, %c0_i32 : i32
    %1 = arith.extui %0 : i1 to i32
    %c0_i32_0 = arith.constant 0 : i32
    %2 = arith.cmpi ne, %1, %c0_i32_0 : i32
    scf.if %2 {
      %cst_20 = arith.constant 0.000000e+00 : f32
      %20 = vector.broadcast %cst_20 : f32 to vector<1x1x4x1xf32>
      %c0_21 = arith.constant 0 : index
      %c0_22 = arith.constant 0 : index
      %c0_23 = arith.constant 0 : index
      %c0_24 = arith.constant 0 : index
      %21 = vector.load %arg4[%c0_21, %c0_22, %c0_23, %c0_24] : memref<1x1x4x1xf32, #tpu.memory_space<vmem>>, vector<1x1x4x1xf32>
      tpu.vector_store %arg4[%c0_21, %c0_22, %c0_23, %c0_24], %20 {strides = array<i32>} : memref<1x1x4x1xf32, #tpu.memory_space<vmem>>, vector<1x1x4x1xf32>,
      %cst_25 = arith.constant 0.000000e+00 : f32
      %22 = vector.broadcast %cst_25 : f32 to vector<1x1x4x4xf32>
      %c0_26 = arith.constant 0 : index
      %c0_27 = arith.constant 0 : index
      %c0_28 = arith.constant 0 : index
      %c0_29 = arith.constant 0 : index
      %23 = vector.load %arg5[%c0_26, %c0_27, %c0_28, %c0_29] : memref<1x1x4x4xf32, #tpu.memory_space<vmem>>, vector<1x1x4x4xf32>
      tpu.vector_store %arg5[%c0_26, %c0_27, %c0_28, %c0_29], %22 {strides = array<i32>} : memref<1x1x4x4xf32, #tpu.memory_space<vmem>>, vector<1x1x4x4xf32>,
    } else {
    }
    %c0 = arith.constant 0 : index
    %c0_1 = arith.constant 0 : index
    %c0_2 = arith.constant 0 : index
    %3 = vector.load %arg3[%c0, %c0_1, %c0_2] : memref<1x4x256xf32, #tpu.memory_space<vmem>>, vector<1x4x256xf32>
    %4 = vector.shape_cast %3 : vector<1x4x256xf32> to vector<4x256xf32>
    %c0_3 = arith.constant 0 : index
    %c0_4 = arith.constant 0 : index
    %c0_5 = arith.constant 0 : index
    %c0_6 = arith.constant 0 : index
    %5 = vector.load %arg4[%c0_3, %c0_4, %c0_5, %c0_6] : memref<1x1x4x1xf32, #tpu.memory_space<vmem>>, vector<1x1x4x1xf32>
    %6 = vector.shape_cast %5 : vector<1x1x4x1xf32> to vector<4x1xf32>
    %cst = arith.constant dense<0.000000e+00> : vector<4xf32>
    %7 = vector.multi_reduction <add>, %4, %cst [1] : vector<4x256xf32> to vector<4xf32>
    %8 = vector.shape_cast %7 : vector<4xf32> to vector<4x1xf32>
    %9 = arith.addf %6, %8 : vector<4x1xf32>
    %c0_7 = arith.constant 0 : index
    %c0_8 = arith.constant 0 : index
    %c0_9 = arith.constant 0 : index
    %c0_10 = arith.constant 0 : index
    %10 = vector.load %arg4[%c0_7, %c0_8, %c0_9, %c0_10] : memref<1x1x4x1xf32, #tpu.memory_space<vmem>>, vector<1x1x4x1xf32>
    %11 = vector.shape_cast %10 : vector<1x1x4x1xf32> to vector<4x1xf32>
    %12 = vector.shape_cast %9 : vector<4x1xf32> to vector<1x1x4x1xf32>
    tpu.vector_store %arg4[%c0_7, %c0_8, %c0_9, %c0_10], %12 {strides = array<i32>} : memref<1x1x4x1xf32, #tpu.memory_space<vmem>>, vector<1x1x4x1xf32>,
    %c0_11 = arith.constant 0 : index
    %c0_12 = arith.constant 0 : index
    %c0_13 = arith.constant 0 : index
    %c0_14 = arith.constant 0 : index
    %13 = vector.load %arg5[%c0_11, %c0_12, %c0_13, %c0_14] : memref<1x1x4x4xf32, #tpu.memory_space<vmem>>, vector<1x1x4x4xf32>
    %14 = vector.shape_cast %13 : vector<1x1x4x4xf32> to vector<4x4xf32>
    %cst_15 = arith.constant dense<0.000000e+00> : vector<4x4xf32>
    %15 = tpu.matmul %4, %4, %cst_15 {dimension_numbers = #tpu.dot_dimension_numbers<[1], [1], [0], [0], [0, 0, 1, 0], [], []>} : vector<4x256xf32>, vector<4x256xf32>, vector<4x4xf32> -> vector<4x4xf32>
    %16 = arith.addf %14, %15 : vector<4x4xf32>
    %c0_16 = arith.constant 0 : index
    %c0_17 = arith.constant 0 : index
    %c0_18 = arith.constant 0 : index
    %c0_19 = arith.constant 0 : index
    %17 = vector.load %arg5[%c0_16, %c0_17, %c0_18, %c0_19] : memref<1x1x4x4xf32, #tpu.memory_space<vmem>>, vector<1x1x4x4xf32>
    %18 = vector.shape_cast %17 : vector<1x1x4x4xf32> to vector<4x4xf32>
    %19 = vector.shape_cast %16 : vector<4x4xf32> to vector<1x1x4x4xf32>
    tpu.vector_store %arg5[%c0_16, %c0_17, %c0_18, %c0_19], %19 {strides = array<i32>} : memref<1x1x4x4xf32, #tpu.memory_space<vmem>>, vector<1x1x4x4xf32>,
    return
  }
  func.func @transform_0(%arg0: i32, %arg1: i32, %arg2: i32) -> (i32, i32, i32) {
    %c1_i32 = arith.constant 1 : i32
    %0 = arith.muli %arg0, %c1_i32 : i32
    %1 = arith.addi %0, %arg2 : i32
    %c0_i32 = arith.constant 0 : i32
    %c0_i32_0 = arith.constant 0 : i32
    return %arg1, %c0_i32, %1 : i32, i32, i32
  }
  func.func @transform_1(%arg0: i32, %arg1: i32, %arg2: i32) -> (i32, i32, i32, i32) {
    %c0_i32 = arith.constant 0 : i32
    %c0_i32_0 = arith.constant 0 : i32
    %c0_i32_1 = arith.constant 0 : i32
    return %arg0, %arg1, %c0_i32, %c0_i32_0 : i32, i32, i32, i32
  }
  func.func @transform_2(%arg0: i32, %arg1: i32, %arg2: i32) -> (i32, i32, i32, i32) {
    %c0_i32 = arith.constant 0 : i32
    %c0_i32_0 = arith.constant 0 : i32
    %c0_i32_1 = arith.constant 0 : i32
    return %arg0, %arg1, %c0_i32, %c0_i32_0 : i32, i32, i32, i32
  }
}

module attributes {stable_mosaic.version = 11 : i64} {
  func.func @_expand_kernel(%arg0: i32, %arg1: i32, %arg2: memref<1x4x256xf32, #tpu.memory_space<vmem>>, %arg3: memref<1x16x4xf32, #tpu.memory_space<vmem>>, %arg4: memref<1x16x1xf32, #tpu.memory_space<vmem>>, %arg5: memref<1x16x256xf32, #tpu.memory_space<vmem>>) attributes {dimension_semantics = [#tpu.dimension_semantics<parallel>, #tpu.dimension_semantics<parallel>], iteration_bounds = array<i64: 2, 1>, scalar_prefetch = 0 : i64, scratch_operands = 0 : i64, tpu.core_type = #tpu.core_type<tc>, window_params = [{transform_indices = @transform_0, window_bounds = array<i64: 1, 4, 256>}, {transform_indices = @transform_1, window_bounds = array<i64: 1, 16, 4>}, {transform_indices = @transform_2, window_bounds = array<i64: 1, 16, 1>}, {transform_indices = @transform_3, window_bounds = array<i64: 1, 16, 256>}]} {
    %c0 = arith.constant 0 : index
    %c0_0 = arith.constant 0 : index
    %c0_1 = arith.constant 0 : index
    %0 = vector.load %arg2[%c0, %c0_0, %c0_1] : memref<1x4x256xf32, #tpu.memory_space<vmem>>, vector<1x4x256xf32>
    %1 = vector.shape_cast %0 : vector<1x4x256xf32> to vector<4x256xf32>
    %c0_2 = arith.constant 0 : index
    %c0_3 = arith.constant 0 : index
    %c0_4 = arith.constant 0 : index
    %2 = vector.load %arg3[%c0_2, %c0_3, %c0_4] : memref<1x16x4xf32, #tpu.memory_space<vmem>>, vector<1x16x4xf32>
    %3 = vector.shape_cast %2 : vector<1x16x4xf32> to vector<16x4xf32>
    %cst = arith.constant dense<0.000000e+00> : vector<16x256xf32>
    %4 = tpu.matmul %3, %1, %cst {dimension_numbers = #tpu.dot_dimension_numbers<[1], [0], [0], [1], [0, 0, 1, 1], [], []>} : vector<16x4xf32>, vector<4x256xf32>, vector<16x256xf32> -> vector<16x256xf32>
    %c0_5 = arith.constant 0 : index
    %c0_6 = arith.constant 0 : index
    %c0_7 = arith.constant 0 : index
    %5 = vector.load %arg4[%c0_5, %c0_6, %c0_7] : memref<1x16x1xf32, #tpu.memory_space<vmem>>, vector<1x16x1xf32>
    %6 = vector.shape_cast %5 : vector<1x16x1xf32> to vector<16x1xf32>
    %7 = vector.broadcast %6 : vector<16x1xf32> to vector<16x256xf32>
    %8 = arith.addf %4, %7 : vector<16x256xf32>
    %c0_8 = arith.constant 0 : index
    %c0_9 = arith.constant 0 : index
    %c0_10 = arith.constant 0 : index
    %9 = vector.load %arg5[%c0_8, %c0_9, %c0_10] : memref<1x16x256xf32, #tpu.memory_space<vmem>>, vector<1x16x256xf32>
    %10 = vector.shape_cast %9 : vector<1x16x256xf32> to vector<16x256xf32>
    %11 = vector.shape_cast %8 : vector<16x256xf32> to vector<1x16x256xf32>
    tpu.vector_store %arg5[%c0_8, %c0_9, %c0_10], %11 {strides = array<i32>} : memref<1x16x256xf32, #tpu.memory_space<vmem>>, vector<1x16x256xf32>,
    return
  }
  func.func @transform_0(%arg0: i32, %arg1: i32) -> (i32, i32, i32) {
    %c0_i32 = arith.constant 0 : i32
    %c0_i32_0 = arith.constant 0 : i32
    return %arg0, %c0_i32, %arg1 : i32, i32, i32
  }
  func.func @transform_1(%arg0: i32, %arg1: i32) -> (i32, i32, i32) {
    %c0_i32 = arith.constant 0 : i32
    %c0_i32_0 = arith.constant 0 : i32
    %c0_i32_1 = arith.constant 0 : i32
    return %arg0, %c0_i32, %c0_i32_0 : i32, i32, i32
  }
  func.func @transform_2(%arg0: i32, %arg1: i32) -> (i32, i32, i32) {
    %c0_i32 = arith.constant 0 : i32
    %c0_i32_0 = arith.constant 0 : i32
    %c0_i32_1 = arith.constant 0 : i32
    return %arg0, %c0_i32, %c0_i32_0 : i32, i32, i32
  }
  func.func @transform_3(%arg0: i32, %arg1: i32) -> (i32, i32, i32) {
    %c0_i32 = arith.constant 0 : i32
    %c0_i32_0 = arith.constant 0 : i32
    return %arg0, %c0_i32, %arg1 : i32, i32, i32
  }
}

</mosaic_0001>

<llo_original>
// kernel: patch_expanding.2
$region0: #{patch_expanding.2}
  #allocation0 [shape = 'u32[]', space=smem, size = 0x4, offset = 0x4, fixed_abs, tag = 'smem constant byte address 0x4 - core index']
  #allocation1 [shape = 'u32[72,128]{1,0:T(1,128)}', space=vmem, size = 0x9000, scoped, tag = 'internal scratch']
  %s0 = inlined_call_operand.vmem [shape: f32[2,4,256], index: 0, kind: input, shape index: {}]
  %s1 = inlined_call_operand.vmem [shape: f32[1,2,4,1], index: 1, kind: output, shape index: {0}]
  %s2 = inlined_call_operand.vmem [shape: f32[1,2,4,4], index: 2, kind: output, shape index: {1}]
  %3 = xla_tuple %s1, %s2
  %s4 = sld [smem:[#allocation0]]
  $region49: #{patch_expanding.2} parent=0
    _
  %s6 = ssub.s32 1, %s4
  %s7 = scalar_select 0, %s6, %s4
  loop: start=0, step=1, limit=4
  $region2: #{patch_expanding.2} parent=0 // loop_pre_header
    _
  $region3: #{patch_expanding.2} parent=0 // loop_header
    %s9 = sphi 0, %s13
    %p10 = scmp.ge.s32.totalorder %s9, 4
    %s16 = sphi 0, %s35
    %s17 = sphi 0, %s31
    %s18 = sphi 0, %s27
    %s19 = sphi 0, %s16
    %s20 = sphi 0, %s17
    %s21 = sphi 0, %s18
    %s22 = sphi 0, %s19
    %s23 = sphi 0, %s20
    %s24 = sphi 0, %s21
    %s42 = sphi 0, %s44
    %s45 = sphi 0, %s42
    %s46 = sphi 0, %s45
    %s62 = sphi 0, %s46
    %s70 = sphi 0, %s72
    %s73 = sphi 0, %s70
    %s74 = sphi 0, %s73
    %s90 = sphi 0, %s74
    %s98 = sphi 0, %s100
    %s101 = sphi 0, %s98
    %s102 = sphi 0, %s101
    %s118 = sphi 0, %s102
  $region4: #{patch_expanding.2} parent=0 // loop_header_branch
    %12 = sbr.rel (%p10) target = $region8
  $region5: #{patch_expanding.2} parent=0 // loop_body
    %s14 = ssub.s32 %s9, 1
    %s15 = ssub.s32 %s9, 2
    %s25 = sadd.s32 1, %s18
    %p26 = scmp.ge.s32.totalorder %s25, 1
    %s27 = scalar_select %p26, 0, %s25
    %s28 = sadd.s32 1, %s17
    %s29 = scalar_select %p26, %s28, %s17
    %p30 = scmp.ge.s32.totalorder %s29, 2
    %s31 = scalar_select %p30, 0, %s29
    %s32 = sadd.s32 1, %s16
    %s33 = scalar_select %p30, %s32, %s16
    %p34 = scmp.ge.s32.totalorder %s33, 1
    %s35 = scalar_select %p34, 0, %s33
    %s36 = sadd.s32 %s16, %s18
    %s37 = sadd.s32 %s35, %s27
    %s38 = ssub.s32 %s17, %s31
    %s39 = ssub.s32 %s36, %s37
    %s40 = sor.u32 %s38, %s39
    %p41 = scmp.eq.s32.totalorder %s40, 0
    %s43 = sadd.s32 %s42, 1
    %s44 = scalar_select %p41, %s42, %s43
    %p47 = pneg %p41
    %p48 = scmp.eq.s32.totalorder %s9, 1
    %p49 = por %p47, %p48
    %p50 = scmp.ne.s32.totalorder %s42, %s45
    %p51 = scmp.eq.s32.totalorder %s9, 0
    %p52 = por %p50, %p51
    %p53 = scmp.ne.s32.totalorder %s42, %s45
    %p54 = scmp.eq.s32.totalorder %s14, 1
    %p55 = por %p53, %p54
    %p56 = scmp.ne.s32.totalorder %s45, %s46
    %p57 = scmp.eq.s32.totalorder %s14, 0
    %p58 = por %p56, %p57
    %p59 = scmp.ne.s32.totalorder %s45, %s46
    %p60 = scmp.eq.s32.totalorder %s15, 1
    %p61 = por %p59, %p60
    %p63 = scmp.ne.s32.totalorder %s46, %s62
    %p64 = scmp.eq.s32.totalorder %s15, 0
    %p65 = por %p63, %p64
    %s66 = ssub.s32 %s16, %s35
    %s67 = ssub.s32 %s17, %s31
    %s68 = sor.u32 %s66, %s67
    %p69 = scmp.eq.s32.totalorder %s68, 0
    %s71 = sadd.s32 %s70, 1
    %s72 = scalar_select %p69, %s70, %s71
    %p75 = pneg %p69
    %p76 = scmp.eq.s32.totalorder %s9, 1
    %p77 = por %p75, %p76
    %p78 = scmp.ne.s32.totalorder %s70, %s73
    %p79 = scmp.eq.s32.totalorder %s9, 0
    %p80 = por %p78, %p79
    %p81 = scmp.ne.s32.totalorder %s70, %s73
    %p82 = scmp.eq.s32.totalorder %s14, 1
    %p83 = por %p81, %p82
    %p84 = scmp.ne.s32.totalorder %s73, %s74
    %p85 = scmp.eq.s32.totalorder %s14, 0
    %p86 = por %p84, %p85
    %p87 = scmp.ne.s32.totalorder %s73, %s74
    %p88 = scmp.eq.s32.totalorder %s15, 1
    %p89 = por %p87, %p88
    %p91 = scmp.ne.s32.totalorder %s74, %s90
    %p92 = scmp.eq.s32.totalorder %s15, 0
    %p93 = por %p91, %p92
    %s94 = ssub.s32 %s16, %s35
    %s95 = ssub.s32 %s17, %s31
    %s96 = sor.u32 %s94, %s95
    %p97 = scmp.eq.s32.totalorder %s96, 0
    %s99 = sadd.s32 %s98, 1
    %s100 = scalar_select %p97, %s98, %s99
    %p103 = pneg %p97
    %p104 = scmp.eq.s32.totalorder %s9, 1
    %p105 = por %p103, %p104
    %p106 = scmp.ne.s32.totalorder %s98, %s101
    %p107 = scmp.eq.s32.totalorder %s9, 0
    %p108 = por %p106, %p107
    %p109 = scmp.ne.s32.totalorder %s98, %s101
    %p110 = scmp.eq.s32.totalorder %s14, 1
    %p111 = por %p109, %p110
    %p112 = scmp.ne.s32.totalorder %s101, %s102
    %p113 = scmp.eq.s32.totalorder %s14, 0
    %p114 = por %p112, %p113
    %p115 = scmp.ne.s32.totalorder %s101, %s102
    %p116 = scmp.eq.s32.totalorder %s15, 1
    %p117 = por %p115, %p116
    %p119 = scmp.ne.s32.totalorder %s102, %s118
    %p120 = scmp.eq.s32.totalorder %s15, 0
    %p121 = por %p119, %p120
    %p122 = scmp.le.s32.totalorder 1, %s9
    %p123 = scmp.lt.s32.totalorder %s9, 3
    %p124 = pnand %p122, %p123
    %p125 = pneg %p124
    // Predicated region
    $region9: #{patch_expanding.2} parent=5 // pred_check
      _
    $region10: #{patch_expanding.2} parent=5 // pred_check_branch
      %127 = sbr.rel (%p124) target = $region12
    $region11: #{patch_expanding.2} parent=5 // pred_region
      %s128 = ssub.s32 %s9, 1
    $region12: #{patch_expanding.2} parent=5 // pred_fallthru
      _
    %p129 = scmp.lt.s32.totalorder %s9, 2
    // Predicated region
    $region13: #{patch_expanding.2} parent=5 // pred_check
      %p130 = pneg %p129
    $region14: #{patch_expanding.2} parent=5 // pred_check_branch
      %132 = sbr.rel (%p130) target = $region16
    $region15: #{patch_expanding.2} parent=5 // pred_region
      // Predicated region
      $region17: #{patch_expanding.2} parent=15 // pred_check
        %p133 = pneg %p52
      $region18: #{patch_expanding.2} parent=15 // pred_check_branch
        %135 = sbr.rel (%p133) target = $region20
      $region19: #{patch_expanding.2} parent=15 // pred_region
        %s136 = sadd.s32 %s16, %s18
        %s137 = smul.u32 2, %s136
        %p138 = scmp.lt.s32.totalorder %s17, 1
        %s139 = scalar_select %p138, %s17, 1
        %p140 = scmp.lt.s32.totalorder %s137, 1
        %s141 = scalar_select %p140, %s137, 1
        %s142 = smul.addr %s139, 2
        %s143 = sadd.s32 %s141, %s142
        %s144 = smul.addr %s143, 4
        %s145 = scalar_lea.vmem %s0, %s144
        %s146 = sadd.s32 %s16, %s18
        %s147 = smul.u32 2, %s146
      $region20: #{patch_expanding.2} parent=15 // pred_fallthru
        _
    $region16: #{patch_expanding.2} parent=5 // pred_fallthru
      _
    %p148 = scmp.le.s32.totalorder 1, %s9
    %p149 = scmp.lt.s32.totalorder %s9, 3
    %p150 = pnand %p148, %p149
    %p151 = pneg %p150
    // Predicated region
    $region21: #{patch_expanding.2} parent=5 // pred_check
      _
    $region22: #{patch_expanding.2} parent=5 // pred_check_branch
      %153 = sbr.rel (%p150) target = $region24
    $region23: #{patch_expanding.2} parent=5 // pred_region
      %s154 = ssub.s32 %s9, 1
      %s155 = sadd.s32 %s19, %s21
      %s156 = smul.u32 2, %s155
      %p157 = scmp.lt.s32.totalorder %s20, 1
      %s158 = scalar_select %p157, %s20, 1
      %p159 = scmp.lt.s32.totalorder %s156, 1
      %s160 = scalar_select %p159, %s156, 1
      %s161 = smul.addr %s158, 2
      %s162 = sadd.s32 %s160, %s161
      %s163 = smul.addr %s162, 4
      %s164 = scalar_lea.vmem %s0, %s163
      %p165 = pneg %p58
      %p166 = pneg %p55
      %p167 = pneg %p86
      %p168 = pneg %p83
      %p169 = scmp.lt.s32.totalorder %s19, 0
      %s170 = scalar_select %p169, %s19, 0
      %p171 = scmp.lt.s32.totalorder %s20, 1
      %s172 = scalar_select %p171, %s20, 1
      %s173 = smul.addr %s170, 2
      %s174 = sadd.s32 %s172, %s173
      %s175 = smul.addr %s174, 4
      %s176 = scalar_lea.vmem %s1, %s175
      %p177 = pneg %p114
      %p178 = pneg %p111
      %p179 = scmp.lt.s32.totalorder %s19, 0
      %s180 = scalar_select %p179, %s19, 0
      %p181 = scmp.lt.s32.totalorder %s20, 1
      %s182 = scalar_select %p181, %s20, 1
      %s183 = smul.addr %s180, 2
      %s184 = sadd.s32 %s182, %s183
      %s185 = smul.addr %s184, 4
      %s186 = scalar_lea.vmem %s2, %s185
      %s187 = sadd.s32 %s19, %s21
      %s188 = smul.u32 2, %s187
      %p189 = scmp.lt.s32.totalorder %s20, 1
      %s190 = scalar_select %p189, %s20, 1
      %p191 = scmp.lt.s32.totalorder %s188, 1
      %s192 = scalar_select %p191, %s188, 1
      %s193 = smul.addr %s190, 2
      %s194 = sadd.s32 %s192, %s193
      %s195 = smul.addr %s194, 4
      %s196 = scalar_lea.vmem %s0, %s195
      %s197 = sadd.s32 %s19, %s21
      %s198 = smul.u32 2, %s197
      %p199 = scmp.lt.s32.totalorder %s19, 0
      %s200 = scalar_select %p199, %s19, 0
      %p201 = scmp.lt.s32.totalorder %s20, 1
      %s202 = scalar_select %p201, %s20, 1
      %s203 = smul.addr %s200, 2
      %s204 = sadd.s32 %s202, %s203
      %s205 = smul.addr %s204, 4
      %s206 = scalar_lea.vmem %s1, %s205
      %p207 = scmp.lt.s32.totalorder %s19, 0
      %s208 = scalar_select %p207, %s19, 0
      %p209 = scmp.lt.s32.totalorder %s20, 1
      %s210 = scalar_select %p209, %s20, 1
      %s211 = smul.addr %s208, 2
      %s212 = sadd.s32 %s210, %s211
      %s213 = smul.addr %s212, 4
      %s214 = scalar_lea.vmem %s2, %s213
      %p215 = scmp.eq.s32.totalorder %s21, 0
      // Predicated region
      $region25: #{patch_expanding.2} parent=23 // pred_check
        %p216 = pneg %p215
      $region26: #{patch_expanding.2} parent=23 // pred_check_branch
        %218 = sbr.rel (%p216) target = $region28
      $region27: #{patch_expanding.2} parent=23 // pred_region
        %vm219 = vcmask 3072
        %220 = vst.msk [vmem:[%s206] sm:$0xf] %vm219, 0.0
        %vm221 = vcmask 27648
        %222 = vst.msk [vmem:[%s214] sm:$0xf] %vm221, 0.0
      $region28: #{patch_expanding.2} parent=23 // pred_fallthru
        _
      %v223 = vld [vmem:[%s196] sm:$0xff]
      %v224 = vld [vmem:[%s206] sm:$0xf]
      %226 = vst [vmem:[#allocation1] ss:$2 sm:$0xff] %v223
      %v227 = vld.sshfl [vmem:[#allocation1] sm:$0xff pattern:$0x75316420]
      %v228 = vld.sshfl [vmem:[#allocation1 + $0x8] sm:$0xff pattern:$0x75316420]
      %vm231 = vcmask 1043456
      %v232 = vsel %vm231, %v227, 0.0
      %v233 = vsel %vm231, %v228, 0.0
      %v234 = vadd.f32 %v232, %v233
      %235 = vadd.xlane.f32.xlu0 %v234
      %v236 = vpop.xlane.xlu0 %235
      %v237 = vadd.f32 %v224, %v236
      %vm238 = vcmask 3072
      %239 = vst.msk [vmem:[%s206] sm:$0xf] %vm238, %v237
      %v240 = vld [vmem:[%s214] sm:$0xf]
      %241 = vst [vmem:[#allocation1] ss:$2 sm:$0xff] %v223
      %v242 = vld.sshfl [vmem:[#allocation1] sm:$0xff pattern:$0x75316420]
      %v243 = vld.sshfl [vmem:[#allocation1 + $0x8] sm:$0xff pattern:$0x75316420]
      %246 = vst [vmem:[#allocation1] ss:$2 sm:$0xff] %v223
      %v247 = vld.sshfl [vmem:[#allocation1] sm:$0xff pattern:$0x75316420]
      %v248 = vld.sshfl [vmem:[#allocation1 + $0x8] sm:$0xff pattern:$0x75316420]
      %251 = vmatpush.xpose.msra.mxu0 0.0
      %252 = vmatpush.xpose.msra.mxu0 0.0
      %253 = vmatpush.xpose.msra.mxu0 0.0
      %254 = vmatpush.xpose.msra.mxu0 0.0
      %255 = vmatpush.xpose.msra.mxu0 0.0
      %256 = vmatpush.xpose.msra.mxu0 0.0
      %257 = vmatpush.xpose.msra.mxu0 0.0
      %258 = vmatpush.xpose.msra.mxu0 0.0
      %259 = vmatpush.xpose.msra.mxu0 0.0
      %260 = vmatpush.xpose.msra.mxu0 0.0
      %261 = vmatpush.xpose.msra.mxu0 0.0
      %262 = vmatpush.xpose.msra.mxu0 0.0
      %263 = vmatpush.xpose.msra.mxu0 0.0
      %264 = vmatpush.xpose.msra.mxu0 0.0
      %265 = vmatpush.xpose.msra.mxu0 0.0
      %266 = vmatpush.xpose.msra.mxu0 %v247
      %267 = vmatmul.f32.gmra.mxu0 %v242
      %v268 = vpop.f32.mrf.mxu0
      %v269 = vadd.f32 0.0, %v268
      %270 = vdwg.mxu0
      %271 = vmatpush.xpose.msra.mxu0 0.0
      %272 = vmatpush.xpose.msra.mxu0 0.0
      %273 = vmatpush.xpose.msra.mxu0 0.0
      %274 = vmatpush.xpose.msra.mxu0 0.0
      %275 = vmatpush.xpose.msra.mxu0 0.0
      %276 = vmatpush.xpose.msra.mxu0 0.0
      %277 = vmatpush.xpose.msra.mxu0 0.0
      %278 = vmatpush.xpose.msra.mxu0 0.0
      %279 = vmatpush.xpose.msra.mxu0 0.0
      %280 = vmatpush.xpose.msra.mxu0 0.0
      %281 = vmatpush.xpose.msra.mxu0 0.0
      %282 = vmatpush.xpose.msra.mxu0 0.0
      %283 = vmatpush.xpose.msra.mxu0 0.0
      %284 = vmatpush.xpose.msra.mxu0 0.0
      %285 = vmatpush.xpose.msra.mxu0 0.0
      %286 = vmatpush.xpose.msra.mxu0 %v248
      %287 = vmatmul.f32.gmra.mxu0 %v243
      %v288 = vpop.f32.mrf.mxu0
      %v289 = vadd.f32 %v269, %v288
      %290 = vdwg.mxu0
      %v291 = vadd.f32 %v240, %v289
      %vm292 = vcmask 27648
      %293 = vst.msk [vmem:[%s214] sm:$0xf] %vm292, %v291
      %p294 = scmp.lt.s32.totalorder %s19, 0
      %s295 = scalar_select %p294, %s19, 0
      %p296 = scmp.lt.s32.totalorder %s20, 1
      %s297 = scalar_select %p296, %s20, 1
      %s298 = smul.addr %s295, 2
      %s299 = sadd.s32 %s297, %s298
      %s300 = smul.addr %s299, 4
      %s301 = scalar_lea.vmem %s1, %s300
      %p302 = scmp.lt.s32.totalorder %s19, 0
      %s303 = scalar_select %p302, %s19, 0
      %p304 = scmp.lt.s32.totalorder %s20, 1
      %s305 = scalar_select %p304, %s20, 1
      %s306 = smul.addr %s303, 2
      %s307 = sadd.s32 %s305, %s306
      %s308 = smul.addr %s307, 4
      %s309 = scalar_lea.vmem %s2, %s308
      // Predicated region
      $region29: #{patch_expanding.2} parent=23 // pred_check
        %p310 = pneg %p83
      $region30: #{patch_expanding.2} parent=23 // pred_check_branch
        %312 = sbr.rel (%p310) target = $region32
      $region31: #{patch_expanding.2} parent=23 // pred_region
        _
      $region32: #{patch_expanding.2} parent=23 // pred_fallthru
        _
      // Predicated region
      $region33: #{patch_expanding.2} parent=23 // pred_check
        %p313 = pneg %p111
      $region34: #{patch_expanding.2} parent=23 // pred_check_branch
        %315 = sbr.rel (%p313) target = $region36
      $region35: #{patch_expanding.2} parent=23 // pred_region
        _
      $region36: #{patch_expanding.2} parent=23 // pred_fallthru
        _
    $region24: #{patch_expanding.2} parent=5 // pred_fallthru
      _
    %p316 = scmp.le.s32.totalorder 2, %s9
    // Predicated region
    $region37: #{patch_expanding.2} parent=5 // pred_check
      %p317 = pneg %p316
    $region38: #{patch_expanding.2} parent=5 // pred_check_branch
      %319 = sbr.rel (%p317) target = $region40
    $region39: #{patch_expanding.2} parent=5 // pred_region
      %s320 = ssub.s32 %s9, 2
      // Predicated region
      $region41: #{patch_expanding.2} parent=39 // pred_check
        %p321 = pneg %p89
      $region42: #{patch_expanding.2} parent=39 // pred_check_branch
        %323 = sbr.rel (%p321) target = $region44
      $region43: #{patch_expanding.2} parent=39 // pred_region
        %p324 = scmp.lt.s32.totalorder %s22, 0
        %s325 = scalar_select %p324, %s22, 0
        %p326 = scmp.lt.s32.totalorder %s23, 1
        %s327 = scalar_select %p326, %s23, 1
        %s328 = smul.addr %s325, 2
        %s329 = sadd.s32 %s327, %s328
        %s330 = smul.addr %s329, 4
        %s331 = scalar_lea.vmem %s1, %s330
      $region44: #{patch_expanding.2} parent=39 // pred_fallthru
        _
      // Predicated region
      $region45: #{patch_expanding.2} parent=39 // pred_check
        %p332 = pneg %p117
      $region46: #{patch_expanding.2} parent=39 // pred_check_branch
        %334 = sbr.rel (%p332) target = $region48
      $region47: #{patch_expanding.2} parent=39 // pred_region
        %p335 = scmp.lt.s32.totalorder %s22, 0
        %s336 = scalar_select %p335, %s22, 0
        %p337 = scmp.lt.s32.totalorder %s23, 1
        %s338 = scalar_select %p337, %s23, 1
        %s339 = smul.addr %s336, 2
        %s340 = sadd.s32 %s338, %s339
        %s341 = smul.addr %s340, 4
        %s342 = scalar_lea.vmem %s2, %s341
      $region48: #{patch_expanding.2} parent=39 // pred_fallthru
        _
    $region40: #{patch_expanding.2} parent=5 // pred_fallthru
      _
  $region6: #{patch_expanding.2} parent=0 // loop_footer
    %s13 = sadd.s32 1, %s9
  $region7: #{patch_expanding.2} parent=0 // loop_footer_branch
    %8 = sbr.rel target = $region3
  $region8: #{patch_expanding.2} parent=0 // loop_exit
    _

// kernel: patch_expanding.3
$region0: #{patch_expanding.3}
  #allocation0 [shape = 'u32[]', space=smem, size = 0x4, offset = 0x4, fixed_abs, tag = 'smem constant byte address 0x4 - core index']
  #allocation1 [shape = 'u32[72,128]{1,0:T(1,128)}', space=vmem, size = 0x9000, scoped, tag = 'internal scratch']
  %s0 = inlined_call_operand.vmem [shape: f32[2,4,256], index: 0, kind: input, shape index: {}]
  %s1 = inlined_call_operand.vmem [shape: f32[2,16,4], index: 1, kind: input, shape index: {}]
  %s2 = inlined_call_operand.vmem [shape: f32[2,16,1], index: 2, kind: input, shape index: {}]
  %s3 = inlined_call_operand.vmem [shape: f32[2,16,256], index: 3, kind: output, shape index: {}]
  %s4 = sld [smem:[#allocation0]]
  $region45: #{patch_expanding.3} parent=0
    _
  %s6 = ssub.s32 1, %s4
  %s7 = scalar_select 0, %s6, %s4
  loop: start=0, step=1, limit=4
  $region2: #{patch_expanding.3} parent=0 // loop_pre_header
    _
  $region3: #{patch_expanding.3} parent=0 // loop_header
    %s9 = sphi 0, %s13
    %p10 = scmp.ge.s32.totalorder %s9, 4
    %s16 = sphi 0, %s28
    %s17 = sphi 0, %s24
    %s18 = sphi 0, %s16
    %s19 = sphi 0, %s17
    %s20 = sphi 0, %s18
    %s21 = sphi 0, %s19
    %s33 = sphi 0, %s35
    %s36 = sphi 0, %s33
    %s37 = sphi 0, %s36
    %s53 = sphi 0, %s37
    %s59 = sphi 0, %s61
    %s62 = sphi 0, %s59
    %s63 = sphi 0, %s62
    %s79 = sphi 0, %s63
    %s85 = sphi 0, %s87
    %s88 = sphi 0, %s85
    %s89 = sphi 0, %s88
    %s105 = sphi 0, %s89
    %s113 = sphi 0, %s115
    %s116 = sphi 0, %s113
    %s117 = sphi 0, %s116
    %s133 = sphi 0, %s117
  $region4: #{patch_expanding.3} parent=0 // loop_header_branch
    %12 = sbr.rel (%p10) target = $region8
  $region5: #{patch_expanding.3} parent=0 // loop_body
    %s14 = ssub.s32 %s9, 1
    %s15 = ssub.s32 %s9, 2
    %s22 = sadd.s32 1, %s17
    %p23 = scmp.ge.s32.totalorder %s22, 1
    %s24 = scalar_select %p23, 0, %s22
    %s25 = sadd.s32 1, %s16
    %s26 = scalar_select %p23, %s25, %s16
    %p27 = scmp.ge.s32.totalorder %s26, 2
    %s28 = scalar_select %p27, 0, %s26
    %s29 = ssub.s32 %s16, %s28
    %s30 = ssub.s32 %s17, %s24
    %s31 = sor.u32 %s29, %s30
    %p32 = scmp.eq.s32.totalorder %s31, 0
    %s34 = sadd.s32 %s33, 1
    %s35 = scalar_select %p32, %s33, %s34
    %p38 = pneg %p32
    %p39 = scmp.eq.s32.totalorder %s9, 1
    %p40 = por %p38, %p39
    %p41 = scmp.ne.s32.totalorder %s33, %s36
    %p42 = scmp.eq.s32.totalorder %s9, 0
    %p43 = por %p41, %p42
    %p44 = scmp.ne.s32.totalorder %s33, %s36
    %p45 = scmp.eq.s32.totalorder %s14, 1
    %p46 = por %p44, %p45
    %p47 = scmp.ne.s32.totalorder %s36, %s37
    %p48 = scmp.eq.s32.totalorder %s14, 0
    %p49 = por %p47, %p48
    %p50 = scmp.ne.s32.totalorder %s36, %s37
    %p51 = scmp.eq.s32.totalorder %s15, 1
    %p52 = por %p50, %p51
    %p54 = scmp.ne.s32.totalorder %s37, %s53
    %p55 = scmp.eq.s32.totalorder %s15, 0
    %p56 = por %p54, %p55
    %s57 = ssub.s32 %s16, %s28
    %p58 = scmp.eq.s32.totalorder %s57, 0
    %s60 = sadd.s32 %s59, 1
    %s61 = scalar_select %p58, %s59, %s60
    %p64 = pneg %p58
    %p65 = scmp.eq.s32.totalorder %s9, 1
    %p66 = por %p64, %p65
    %p67 = scmp.ne.s32.totalorder %s59, %s62
    %p68 = scmp.eq.s32.totalorder %s9, 0
    %p69 = por %p67, %p68
    %p70 = scmp.ne.s32.totalorder %s59, %s62
    %p71 = scmp.eq.s32.totalorder %s14, 1
    %p72 = por %p70, %p71
    %p73 = scmp.ne.s32.totalorder %s62, %s63
    %p74 = scmp.eq.s32.totalorder %s14, 0
    %p75 = por %p73, %p74
    %p76 = scmp.ne.s32.totalorder %s62, %s63
    %p77 = scmp.eq.s32.totalorder %s15, 1
    %p78 = por %p76, %p77
    %p80 = scmp.ne.s32.totalorder %s63, %s79
    %p81 = scmp.eq.s32.totalorder %s15, 0
    %p82 = por %p80, %p81
    %s83 = ssub.s32 %s16, %s28
    %p84 = scmp.eq.s32.totalorder %s83, 0
    %s86 = sadd.s32 %s85, 1
    %s87 = scalar_select %p84, %s85, %s86
    %p90 = pneg %p84
    %p91 = scmp.eq.s32.totalorder %s9, 1
    %p92 = por %p90, %p91
    %p93 = scmp.ne.s32.totalorder %s85, %s88
    %p94 = scmp.eq.s32.totalorder %s9, 0
    %p95 = por %p93, %p94
    %p96 = scmp.ne.s32.totalorder %s85, %s88
    %p97 = scmp.eq.s32.totalorder %s14, 1
    %p98 = por %p96, %p97
    %p99 = scmp.ne.s32.totalorder %s88, %s89
    %p100 = scmp.eq.s32.totalorder %s14, 0
    %p101 = por %p99, %p100
    %p102 = scmp.ne.s32.totalorder %s88, %s89
    %p103 = scmp.eq.s32.totalorder %s15, 1
    %p104 = por %p102, %p103
    %p106 = scmp.ne.s32.totalorder %s89, %s105
    %p107 = scmp.eq.s32.totalorder %s15, 0
    %p108 = por %p106, %p107
    %s109 = ssub.s32 %s16, %s28
    %s110 = ssub.s32 %s17, %s24
    %s111 = sor.u32 %s109, %s110
    %p112 = scmp.eq.s32.totalorder %s111, 0
    %s114 = sadd.s32 %s113, 1
    %s115 = scalar_select %p112, %s113, %s114
    %p118 = pneg %p112
    %p119 = scmp.eq.s32.totalorder %s9, 1
    %p120 = por %p118, %p119
    %p121 = scmp.ne.s32.totalorder %s113, %s116
    %p122 = scmp.eq.s32.totalorder %s9, 0
    %p123 = por %p121, %p122
    %p124 = scmp.ne.s32.totalorder %s113, %s116
    %p125 = scmp.eq.s32.totalorder %s14, 1
    %p126 = por %p124, %p125
    %p127 = scmp.ne.s32.totalorder %s116, %s117
    %p128 = scmp.eq.s32.totalorder %s14, 0
    %p129 = por %p127, %p128
    %p130 = scmp.ne.s32.totalorder %s116, %s117
    %p131 = scmp.eq.s32.totalorder %s15, 1
    %p132 = por %p130, %p131
    %p134 = scmp.ne.s32.totalorder %s117, %s133
    %p135 = scmp.eq.s32.totalorder %s15, 0
    %p136 = por %p134, %p135
    %p137 = scmp.le.s32.totalorder 1, %s9
    %p138 = scmp.lt.s32.totalorder %s9, 3
    %p139 = pnand %p137, %p138
    %p140 = pneg %p139
    // Predicated region
    $region9: #{patch_expanding.3} parent=5 // pred_check
      _
    $region10: #{patch_expanding.3} parent=5 // pred_check_branch
      %142 = sbr.rel (%p139) target = $region12
    $region11: #{patch_expanding.3} parent=5 // pred_region
      %s143 = ssub.s32 %s9, 1
    $region12: #{patch_expanding.3} parent=5 // pred_fallthru
      _
    %p144 = scmp.lt.s32.totalorder %s9, 2
    // Predicated region
    $region13: #{patch_expanding.3} parent=5 // pred_check
      %p145 = pneg %p144
    $region14: #{patch_expanding.3} parent=5 // pred_check_branch
      %147 = sbr.rel (%p145) target = $region16
    $region15: #{patch_expanding.3} parent=5 // pred_region
      // Predicated region
      $region17: #{patch_expanding.3} parent=15 // pred_check
        %p148 = pneg %p43
      $region18: #{patch_expanding.3} parent=15 // pred_check_branch
        %150 = sbr.rel (%p148) target = $region20
      $region19: #{patch_expanding.3} parent=15 // pred_region
        %s151 = smul.u32 2, %s17
        %p152 = scmp.lt.s32.totalorder %s16, 1
        %s153 = scalar_select %p152, %s16, 1
        %p154 = scmp.lt.s32.totalorder %s151, 1
        %s155 = scalar_select %p154, %s151, 1
        %s156 = smul.addr %s153, 2
        %s157 = sadd.s32 %s155, %s156
        %s158 = smul.addr %s157, 4
        %s159 = scalar_lea.vmem %s0, %s158
        %s160 = smul.u32 2, %s17
      $region20: #{patch_expanding.3} parent=15 // pred_fallthru
        _
      // Predicated region
      $region21: #{patch_expanding.3} parent=15 // pred_check
        %p161 = pneg %p69
      $region22: #{patch_expanding.3} parent=15 // pred_check_branch
        %163 = sbr.rel (%p161) target = $region24
      $region23: #{patch_expanding.3} parent=15 // pred_region
        %p164 = scmp.lt.s32.totalorder %s16, 1
        %s165 = scalar_select %p164, %s16, 1
        %s166 = smul.addr %s165, 2
        %s167 = smul.addr %s166, 8
        %s168 = scalar_lea.vmem %s1, %s167
      $region24: #{patch_expanding.3} parent=15 // pred_fallthru
        _
      // Predicated region
      $region25: #{patch_expanding.3} parent=15 // pred_check
        %p169 = pneg %p95
      $region26: #{patch_expanding.3} parent=15 // pred_check_branch
        %171 = sbr.rel (%p169) target = $region28
      $region27: #{patch_expanding.3} parent=15 // pred_region
        %p172 = scmp.lt.s32.totalorder %s16, 1
        %s173 = scalar_select %p172, %s16, 1
        %s174 = smul.addr %s173, 2
        %s175 = smul.addr %s174, 8
        %s176 = scalar_lea.vmem %s2, %s175
      $region28: #{patch_expanding.3} parent=15 // pred_fallthru
        _
    $region16: #{patch_expanding.3} parent=5 // pred_fallthru
      _
    %p177 = scmp.le.s32.totalorder 1, %s9
    %p178 = scmp.lt.s32.totalorder %s9, 3
    %p179 = pnand %p177, %p178
    %p180 = pneg %p179
    // Predicated region
    $region29: #{patch_expanding.3} parent=5 // pred_check
      _
    $region30: #{patch_expanding.3} parent=5 // pred_check_branch
      %182 = sbr.rel (%p179) target = $region32
    $region31: #{patch_expanding.3} parent=5 // pred_region
      %s183 = ssub.s32 %s9, 1
      %s184 = smul.u32 2, %s19
      %p185 = scmp.lt.s32.totalorder %s18, 1
      %s186 = scalar_select %p185, %s18, 1
      %p187 = scmp.lt.s32.totalorder %s184, 1
      %s188 = scalar_select %p187, %s184, 1
      %s189 = smul.addr %s186, 2
      %s190 = sadd.s32 %s188, %s189
      %s191 = smul.addr %s190, 4
      %s192 = scalar_lea.vmem %s0, %s191
      %p193 = pneg %p49
      %p194 = pneg %p46
      %p195 = scmp.lt.s32.totalorder %s18, 1
      %s196 = scalar_select %p195, %s18, 1
      %s197 = smul.addr %s196, 2
      %s198 = smul.addr %s197, 8
      %s199 = scalar_lea.vmem %s1, %s198
      %p200 = pneg %p75
      %p201 = pneg %p72
      %p202 = scmp.lt.s32.totalorder %s18, 1
      %s203 = scalar_select %p202, %s18, 1
      %s204 = smul.addr %s203, 2
      %s205 = smul.addr %s204, 8
      %s206 = scalar_lea.vmem %s2, %s205
      %p207 = pneg %p101
      %p208 = pneg %p98
      %p209 = pneg %p129
      %p210 = pneg %p126
      %s211 = smul.u32 2, %s19
      %p212 = scmp.lt.s32.totalorder %s18, 1
      %s213 = scalar_select %p212, %s18, 1
      %p214 = scmp.lt.s32.totalorder %s211, 1
      %s215 = scalar_select %p214, %s211, 1
      %s216 = smul.addr %s213, 4
      %s217 = sadd.s32 %s215, %s216
      %s218 = smul.addr %s217, 8
      %s219 = scalar_lea.vmem %s3, %s218
      %s220 = smul.u32 2, %s19
      %p221 = scmp.lt.s32.totalorder %s18, 1
      %s222 = scalar_select %p221, %s18, 1
      %p223 = scmp.lt.s32.totalorder %s220, 1
      %s224 = scalar_select %p223, %s220, 1
      %s225 = smul.addr %s222, 2
      %s226 = sadd.s32 %s224, %s225
      %s227 = smul.addr %s226, 4
      %s228 = scalar_lea.vmem %s0, %s227
      %s229 = smul.u32 2, %s19
      %p230 = scmp.lt.s32.totalorder %s18, 1
      %s231 = scalar_select %p230, %s18, 1
      %s232 = smul.addr %s231, 2
      %s233 = smul.addr %s232, 8
      %s234 = scalar_lea.vmem %s1, %s233
      %p235 = scmp.lt.s32.totalorder %s18, 1
      %s236 = scalar_select %p235, %s18, 1
      %s237 = smul.addr %s236, 2
      %s238 = smul.addr %s237, 8
      %s239 = scalar_lea.vmem %s2, %s238
      %s240 = smul.u32 2, %s19
      %p241 = scmp.lt.s32.totalorder %s18, 1
      %s242 = scalar_select %p241, %s18, 1
      %p243 = scmp.lt.s32.totalorder %s240, 1
      %s244 = scalar_select %p243, %s240, 1
      %s245 = smul.addr %s242, 4
      %s246 = sadd.s32 %s244, %s245
      %s247 = smul.addr %s246, 8
      %s248 = scalar_lea.vmem %s3, %s247
      %s249 = smul.u32 2, %s19
      %v250 = vld [vmem:[%s228] sm:$0xff]
      %v251 = vld [vmem:[%s234] sm:$0xff]
      %v252 = vld [vmem:[%s234 + $0x8] sm:$0xff]
      %v253 = vld [vmem:[%s239] sm:$0xff]
      %v254 = vld [vmem:[%s239 + $0x8] sm:$0xff]
      %256 = vset.pattern.permute.xlu0 0
      %257 = vperm.xlu0 %256, %v253
      %v258 = vpop.permute.xlu0 %257
      %261 = vset.pattern.permute.xlu0 0
      %262 = vperm.xlu0 %261, %v254
      %v263 = vpop.permute.xlu0 %262
      %266 = vst [vmem:[#allocation1] ss:$2 sm:$0xff] %v250
      %v267 = vld.sshfl [vmem:[#allocation1] sm:$0xff pattern:$0x75316420]
      %v268 = vld.sshfl [vmem:[#allocation1 + $0x8] sm:$0xff pattern:$0x75316420]
      %vm269 = vcmask 31744
      %v271 = vsel %vm269, %v251, 0
      %v274 = vsel %vm269, %v252, 0
      %vm276 = vcmask 1043456
      %v277 = vsel %vm276, %v267, 0
      %v279 = vsel %vm276, %v268, 0
      %281 = vmatpush.msra.mxu0 0.0
      %282 = vmatpush.msra.mxu0 0.0
      %283 = vmatpush.msra.mxu0 0.0
      %284 = vmatpush.msra.mxu0 0.0
      %285 = vmatpush.msra.mxu0 0.0
      %286 = vmatpush.msra.mxu0 0.0
      %287 = vmatpush.msra.mxu0 0.0
      %288 = vmatpush.msra.mxu0 0.0
      %289 = vmatpush.msra.mxu0 0.0
      %290 = vmatpush.msra.mxu0 0.0
      %291 = vmatpush.msra.mxu0 0.0
      %292 = vmatpush.msra.mxu0 0.0
      %293 = vmatpush.msra.mxu0 0.0
      %294 = vmatpush.msra.mxu0 0.0
      %295 = vmatpush.msra.mxu0 0.0
      %296 = vmatpush.msra.mxu0 %v277
      %297 = vmatmul.f32.gmra.mxu0 %v271
      %v298 = vpop.f32.mrf.mxu0
      %v299 = vadd.f32 %v258, %v298
      %300 = vmatmul.f32.gmra.mxu0 %v274
      %v301 = vpop.f32.mrf.mxu0
      %v302 = vadd.f32 %v263, %v301
      %303 = vdwg.mxu0
      %304 = vmatpush.msra.mxu0 0.0
      %305 = vmatpush.msra.mxu0 0.0
      %306 = vmatpush.msra.mxu0 0.0
      %307 = vmatpush.msra.mxu0 0.0
      %308 = vmatpush.msra.mxu0 0.0
      %309 = vmatpush.msra.mxu0 0.0
      %310 = vmatpush.msra.mxu0 0.0
      %311 = vmatpush.msra.mxu0 0.0
      %312 = vmatpush.msra.mxu0 0.0
      %313 = vmatpush.msra.mxu0 0.0
      %314 = vmatpush.msra.mxu0 0.0
      %315 = vmatpush.msra.mxu0 0.0
      %316 = vmatpush.msra.mxu0 0.0
      %317 = vmatpush.msra.mxu0 0.0
      %318 = vmatpush.msra.mxu0 0.0
      %319 = vmatpush.msra.mxu0 %v279
      %320 = vmatmul.f32.gmra.mxu0 %v271
      %v321 = vpop.f32.mrf.mxu0
      %v322 = vadd.f32 %v258, %v321
      %323 = vmatmul.f32.gmra.mxu0 %v274
      %v324 = vpop.f32.mrf.mxu0
      %v325 = vadd.f32 %v263, %v324
      %326 = vdwg.mxu0
      %327 = vst [vmem:[%s248] sm:$0xff] %v299
      %328 = vst [vmem:[%s248 + $0x8] sm:$0xff] %v322
      %329 = vst [vmem:[%s248 + $0x10] sm:$0xff] %v302
      %330 = vst [vmem:[%s248 + $0x18] sm:$0xff] %v325
      %s331 = smul.u32 2, %s19
      %p332 = scmp.lt.s32.totalorder %s18, 1
      %s333 = scalar_select %p332, %s18, 1
      %p334 = scmp.lt.s32.totalorder %s331, 1
      %s335 = scalar_select %p334, %s331, 1
      %s336 = smul.addr %s333, 4
      %s337 = sadd.s32 %s335, %s336
      %s338 = smul.addr %s337, 8
      %s339 = scalar_lea.vmem %s3, %s338
      // Predicated region
      $region33: #{patch_expanding.3} parent=31 // pred_check
        %p340 = pneg %p126
      $region34: #{patch_expanding.3} parent=31 // pred_check_branch
        %342 = sbr.rel (%p340) target = $region36
      $region35: #{patch_expanding.3} parent=31 // pred_region
        %s343 = smul.u32 2, %s19
      $region36: #{patch_expanding.3} parent=31 // pred_fallthru
        _
    $region32: #{patch_expanding.3} parent=5 // pred_fallthru
      _
    %p344 = scmp.le.s32.totalorder 2, %s9
    // Predicated region
    $region37: #{patch_expanding.3} parent=5 // pred_check
      %p345 = pneg %p344
    $region38: #{patch_expanding.3} parent=5 // pred_check_branch
      %347 = sbr.rel (%p345) target = $region40
    $region39: #{patch_expanding.3} parent=5 // pred_region
      %s348 = ssub.s32 %s9, 2
      // Predicated region
      $region41: #{patch_expanding.3} parent=39 // pred_check
        %p349 = pneg %p132
      $region42: #{patch_expanding.3} parent=39 // pred_check_branch
        %351 = sbr.rel (%p349) target = $region44
      $region43: #{patch_expanding.3} parent=39 // pred_region
        %s352 = smul.u32 2, %s21
        %p353 = scmp.lt.s32.totalorder %s20, 1
        %s354 = scalar_select %p353, %s20, 1
        %p355 = scmp.lt.s32.totalorder %s352, 1
        %s356 = scalar_select %p355, %s352, 1
        %s357 = smul.addr %s354, 4
        %s358 = sadd.s32 %s356, %s357
        %s359 = smul.addr %s358, 8
        %s360 = scalar_lea.vmem %s3, %s359
      $region44: #{patch_expanding.3} parent=39 // pred_fallthru
        _
    $region40: #{patch_expanding.3} parent=5 // pred_fallthru
      _
  $region6: #{patch_expanding.3} parent=0 // loop_footer
    %s13 = sadd.s32 1, %s9
  $region7: #{patch_expanding.3} parent=0 // loop_footer_branch
    %8 = sbr.rel target = $region3
  $region8: #{patch_expanding.3} parent=0 // loop_exit
    _

</llo_original>
